<compile_context>
chip_gen: v5e
topology: v5e:2x2
jax: 0.10.0
libtpu: 0.0.40
codegen_flags: <defaults>
</compile_context>

<pallas_src>
import math
import numpy as np
import jax
import jax.numpy as jnp
from jax import lax
from jax.experimental import pallas as pl
from jax.experimental.pallas import tpu as pltpu


def get_fourier_weights_for_mel(window_size, hanning=True):
    frec = np.linspace(-window_size // 2, 0, window_size // 2 + 1)
    time = np.linspace(0, window_size - 1, window_size)
    if hanning:
        hanning_window = np.hanning(window_size)
    filters_cos = []
    filters_sin = []
    for f in frec:
        filters_cos.append(np.cos(2 * np.pi * f * time / window_size))
        filters_sin.append(np.sin(2 * np.pi * f * time / window_size))
    if hanning:
        filters_cos = np.array(filters_cos)[::-1] * hanning_window
        filters_sin = np.array(filters_sin)[::-1] * hanning_window
    else:
        filters_cos = np.array(filters_cos)[::-1]
        filters_sin = np.array(filters_sin)[::-1]
    return (filters_cos, filters_sin)


_LOG10_SCALE = 10.0 / math.log(10.0)   # 10*log10(p) == _LOG10_SCALE * ln(p)


def _stft_kernel(frames_ref, w_ref, o_ref):
    # frames_ref: (1, tT, K)   w_ref: (2*F_pad, K)   o_ref: (1, F, tT)
    fr = frames_ref[0]                                        # [tT, K]
    # Single fused MXU matmul (cos rows stacked over sin rows), contracting
    # K on both operands: W @ fr^T  ->  [2*F_pad, tT].
    cs = lax.dot_general(
        w_ref[...], fr,
        dimension_numbers=(((1,), (1,)), ((), ())),
        preferred_element_type=jnp.float32)
    f_pad = w_ref.shape[0] // 2                               # static int
    c = cs[:f_pad]                                            # [F_pad, tT]
    s = cs[f_pad:]                                            # [F_pad, tT]
    power = c * c + s * s                                     # [F_pad, tT]
    db = _LOG10_SCALE * jnp.log(power)                        # 10*log10(power)
    n_f = o_ref.shape[1]
    # Drop the zero-padded filter rows (their power is exactly 0 -> -inf)
    # before storing; output tile is already in NCW layout [F, tT].
    o_ref[0] = db[:n_f].astype(o_ref.dtype)


def stft_model_forward(x, w_fused, window_size, hop_size, n_filters):
    """x: [B, 1, L] float32.  Returns [B, F, T_out] (PyTorch NCW layout)."""
    B, _, L = x.shape
    K = window_size
    hop = hop_size
    F = n_filters
    assert K % hop == 0, "strided framing requires window_size % hop_size == 0"
    R = K // hop
    T = (L - K) // hop + 1

    # ---- framing without an XLA gather ---------------------------------
    # View the used samples as hop-sized chunks; frame t is the
    # concatenation of chunks t .. t+R-1 (pure slices + concat, no gather).
    n_chunks = T + R - 1
    chunks = x[:, 0, : n_chunks * hop].reshape(B, n_chunks, hop)
    frames = jnp.concatenate(
        [chunks[:, r:r + T, :] for r in range(R)], axis=2)    # [B, T, K]

    # ---- tile size over T ------------------------------------------------
    # Multiple of 128 (lane-dense output stores) when T is large, otherwise
    # the full (small) T.  Blocks stay well under the scoped-VMEM defaults of
    # every generation (v5e/v6e/v7x); on v6e this could be raised to 512-1024
    # together with vmem_limit_bytes for a few more % of HBM roofline.
    if T <= 128:
        t_tile = T
    elif T < 256:
        t_tile = 128
    else:
        t_tile = 256

    grid = (B, pl.cdiv(T, t_tile))
    two_f_pad = w_fused.shape[0]

    out = pl.pallas_call(
        _stft_kernel,
        out_shape=jax.ShapeDtypeStruct((B, F, T), jnp.float32),
        grid_spec=pltpu.PrefetchScalarGridSpec(
            num_scalar_prefetch=0,
            grid=grid,
            in_specs=[
                pl.BlockSpec((1, t_tile, K), lambda b, t: (b, t, 0)),
                # Constant block index -> weights fetched once, stay resident.
                pl.BlockSpec((two_f_pad, K), lambda b, t: (0, 0)),
            ],
            out_specs=pl.BlockSpec((1, F, t_tile), lambda b, t: (b, 0, t)),
        ),
        compiler_params=pltpu.CompilerParams(
            dimension_semantics=("parallel", "parallel")),
    )(frames, w_fused)
    return out                                                # [B, F, T]


if __name__ == "__main__":
    # Small shapes consistent with the module (scaled-down window/hop).
    window_size = 256
    hop_size = 64
    B, L = 2, 1024
    F = window_size // 2 + 1                                  # 129

    # Deterministic Fourier-basis weights (same construction as __init__),
    # fused into a single [2*F_pad, K] matrix (F padded to a multiple of 8).
    cos_w, sin_w = get_fourier_weights_for_mel(window_size)   # [F, K] each
    f_pad = ((F + 7) // 8) * 8
    w_fused_np = np.zeros((2 * f_pad, window_size), dtype=np.float32)
    w_fused_np[:F] = cos_w
    w_fused_np[f_pad:f_pad + F] = sin_w
    w_fused = jnp.asarray(w_fused_np)

    key = jax.random.PRNGKey(0)
    x = jax.random.normal(key, (B, 1, L), dtype=jnp.float32)

    out = stft_model_forward(x, w_fused, window_size, hop_size, F)
    out = jax.block_until_ready(out)

    # Pure-JAX reference using an independent (gather-based) framing path.
    T = (L - window_size) // hop_size + 1
    starts = jnp.arange(T) * hop_size
    idx = starts[:, None] + jnp.arange(window_size)[None, :]
    frames_ref = x[:, 0, :][:, idx]                           # [B, T, K]
    cw = jnp.asarray(np.ascontiguousarray(cos_w), dtype=jnp.float32)
    sw = jnp.asarray(np.ascontiguousarray(sin_w), dtype=jnp.float32)
    c = jnp.einsum("btk,fk->bft", frames_ref, cw,
                   precision=lax.Precision.HIGHEST)
    s = jnp.einsum("btk,fk->bft", frames_ref, sw,
                   precision=lax.Precision.HIGHEST)
    ref = 10.0 * jnp.log10(c * c + s * s)                     # [B, F, T]

    assert out.shape == (B, F, T)
    # dB comparison: where spectral power is near zero, fp noise is amplified
    # through the log, so a small absolute dB slack is used.  Any real bug
    # (wrong framing / weights / layout) shows up as errors of many dB.
    np.testing.assert_allclose(np.asarray(out), np.asarray(ref),
                               rtol=1e-3, atol=2e-2)

    print("KERNEL_OK")
</pallas_src>

<mosaic_0001>
module attributes {stable_mosaic.version = 11 : i64} {
  func.func @_stft_kernel(%arg0: i32, %arg1: i32, %arg2: memref<1x13x256xf32, #tpu.memory_space<vmem>>, %arg3: memref<272x256xf32, #tpu.memory_space<vmem>>, %arg4: memref<1x129x13xf32, #tpu.memory_space<vmem>>) attributes {dimension_semantics = [#tpu.dimension_semantics<parallel>, #tpu.dimension_semantics<parallel>], iteration_bounds = array<i64: 2, 1>, scalar_prefetch = 0 : i64, scratch_operands = 0 : i64, tpu.core_type = #tpu.core_type<tc>, window_params = [{transform_indices = @transform_0, window_bounds = array<i64: 1, 13, 256>}, {pipeline_mode = #tpu.pipeline_mode<synchronous>, transform_indices = @transform_1, window_bounds = array<i64: 272, 256>}, {transform_indices = @transform_2, window_bounds = array<i64: 1, 129, 13>}]} {
    %c0 = arith.constant 0 : index
    %c0_0 = arith.constant 0 : index
    %c0_1 = arith.constant 0 : index
    %0 = vector.load %arg2[%c0, %c0_0, %c0_1] : memref<1x13x256xf32, #tpu.memory_space<vmem>>, vector<1x13x256xf32>
    %1 = vector.shape_cast %0 : vector<1x13x256xf32> to vector<13x256xf32>
    %c0_2 = arith.constant 0 : index
    %c0_3 = arith.constant 0 : index
    %2 = vector.load %arg3[%c0_2, %c0_3] : memref<272x256xf32, #tpu.memory_space<vmem>>, vector<272x256xf32>
    %cst = arith.constant dense<0.000000e+00> : vector<272x13xf32>
    %3 = tpu.matmul %2, %1, %cst {dimension_numbers = #tpu.dot_dimension_numbers<[1], [1], [0], [0], [0, 0, 1, 0], [], []>} : vector<272x256xf32>, vector<13x256xf32>, vector<272x13xf32> -> vector<272x13xf32>
    %4 = vector.extract_strided_slice %3 {offsets = [0, 0], sizes = [136, 13], strides = [1, 1]} : vector<272x13xf32> to vector<136x13xf32>
    %5 = vector.extract_strided_slice %3 {offsets = [136, 0], sizes = [136, 13], strides = [1, 1]} : vector<272x13xf32> to vector<136x13xf32>
    %6 = arith.mulf %4, %4 : vector<136x13xf32>
    %7 = arith.mulf %5, %5 : vector<136x13xf32>
    %8 = arith.addf %6, %7 : vector<136x13xf32>
    %9 = math.log %8 : vector<136x13xf32>
    %cst_4 = arith.constant 4.34294462 : f32
    %10 = vector.broadcast %cst_4 : f32 to vector<136x13xf32>
    %11 = arith.mulf %10, %9 : vector<136x13xf32>
    %12 = vector.extract_strided_slice %11 {offsets = [0, 0], sizes = [129, 13], strides = [1, 1]} : vector<136x13xf32> to vector<129x13xf32>
    %c0_5 = arith.constant 0 : index
    %c0_6 = arith.constant 0 : index
    %c0_7 = arith.constant 0 : index
    %13 = vector.load %arg4[%c0_5, %c0_6, %c0_7] : memref<1x129x13xf32, #tpu.memory_space<vmem>>, vector<1x129x13xf32>
    %14 = vector.shape_cast %13 : vector<1x129x13xf32> to vector<129x13xf32>
    %15 = vector.shape_cast %12 : vector<129x13xf32> to vector<1x129x13xf32>
    tpu.vector_store %arg4[%c0_5, %c0_6, %c0_7], %15 {strides = array<i32>} : memref<1x129x13xf32, #tpu.memory_space<vmem>>, vector<1x129x13xf32>,
    return
  }
  func.func @transform_0(%arg0: i32, %arg1: i32) -> (i32, i32, i32) {
    %c0_i32 = arith.constant 0 : i32
    %c0_i32_0 = arith.constant 0 : i32
    return %arg0, %arg1, %c0_i32 : i32, i32, i32
  }
  func.func @transform_1(%arg0: i32, %arg1: i32) -> (i32, i32) {
    %c0_i32 = arith.constant 0 : i32
    %c0_i32_0 = arith.constant 0 : i32
    %c0_i32_1 = arith.constant 0 : i32
    return %c0_i32, %c0_i32_0 : i32, i32
  }
  func.func @transform_2(%arg0: i32, %arg1: i32) -> (i32, i32, i32) {
    %c0_i32 = arith.constant 0 : i32
    %c0_i32_0 = arith.constant 0 : i32
    return %arg0, %c0_i32, %arg1 : i32, i32, i32
  }
}

</mosaic_0001>

<llo_original>
// kernel: tpu_custom_call.1
$region0: #{tpu_custom_call.1}
  #allocation0 [shape = 'u32[]', space=smem, size = 0x4, offset = 0x4, fixed_abs, tag = 'smem constant byte address 0x4 - core index']
  #allocation1 [shape = 'u32[72,128]{1,0:T(1,128)}', space=vmem, size = 0x9000, scoped, tag = 'internal scratch']
  %s0 = inlined_call_operand.vmem [shape: f32[2,13,256], index: 0, kind: input, shape index: {}]
  %s1 = inlined_call_operand.hbm [shape: f32[272,256], index: 1, kind: input, shape index: {}]
  %s2 = inlined_call_operand.vmem [shape: f32[2,129,13], index: 2, kind: output, shape index: {}]
  %s3 = sld [smem:[#allocation0]]
  $region45: #{tpu_custom_call.1} parent=0
    _
  %s5 = ssub.s32 1, %s3
  %s6 = scalar_select 0, %s5, %s3
  $region1: #{tpu_custom_call.1} parent=0
    #allocation2 [shape = 'u8[278528]{0}', space=vmem, size = 0x44000, scoped, tag = 'input window, operand 1, single buffered']
    #allocation3 [shape = 's32[2]{0}', space=sflag, size = 0x8, scoped, tag = 'scoped memory for tpu_custom_call.1']
    %7 = vsyncpa [#allocation3], 0
    loop: start=0, step=1, limit=4
    $region2: #{tpu_custom_call.1} parent=1 // loop_pre_header
      _
    $region3: #{tpu_custom_call.1} parent=1 // loop_header
      %s9 = sphi 0, %s13
      %p10 = scmp.ge.s32.totalorder %s9, 4
      %s16 = sphi 0, %s28
      %s17 = sphi 0, %s24
      %s18 = sphi 0, %s16
      %s19 = sphi 0, %s17
      %s20 = sphi 0, %s18
      %s21 = sphi 0, %s19
      %s33 = sphi 0, %s35
      %s36 = sphi 0, %s33
      %s37 = sphi 0, %s36
      %s53 = sphi 0, %s37
      %s57 = sphi 0, %s57
      %s59 = sphi 0, %s57
      %s60 = sphi 0, %s59
      %s74 = sphi 0, %s60
      %s82 = sphi 0, %s84
      %s85 = sphi 0, %s82
      %s86 = sphi 0, %s85
      %s102 = sphi 0, %s86
    $region4: #{tpu_custom_call.1} parent=1 // loop_header_branch
      %12 = sbr.rel (%p10) target = $region8
    $region5: #{tpu_custom_call.1} parent=1 // loop_body
      %s14 = ssub.s32 %s9, 1
      %s15 = ssub.s32 %s9, 2
      %s22 = sadd.s32 1, %s17
      %p23 = scmp.ge.s32.totalorder %s22, 1
      %s24 = scalar_select %p23, 0, %s22
      %s25 = sadd.s32 1, %s16
      %s26 = scalar_select %p23, %s25, %s16
      %p27 = scmp.ge.s32.totalorder %s26, 2
      %s28 = scalar_select %p27, 0, %s26
      %s29 = ssub.s32 %s16, %s28
      %s30 = ssub.s32 %s17, %s24
      %s31 = sor.u32 %s29, %s30
      %p32 = scmp.eq.s32.totalorder %s31, 0
      %s34 = sadd.s32 %s33, 1
      %s35 = scalar_select %p32, %s33, %s34
      %p38 = pneg %p32
      %p39 = scmp.eq.s32.totalorder %s9, 1
      %p40 = por %p38, %p39
      %p41 = scmp.ne.s32.totalorder %s33, %s36
      %p42 = scmp.eq.s32.totalorder %s9, 0
      %p43 = por %p41, %p42
      %p44 = scmp.ne.s32.totalorder %s33, %s36
      %p45 = scmp.eq.s32.totalorder %s14, 1
      %p46 = por %p44, %p45
      %p47 = scmp.ne.s32.totalorder %s36, %s37
      %p48 = scmp.eq.s32.totalorder %s14, 0
      %p49 = por %p47, %p48
      %p50 = scmp.ne.s32.totalorder %s36, %s37
      %p51 = scmp.eq.s32.totalorder %s15, 1
      %p52 = por %p50, %p51
      %p54 = scmp.ne.s32.totalorder %s37, %s53
      %p55 = scmp.eq.s32.totalorder %s15, 0
      %p56 = por %p54, %p55
      %s58 = sadd.s32 %s57, 1
      %p61 = scmp.eq.s32.totalorder %s9, 1
      %p62 = scmp.ne.s32.totalorder %s57, %s59
      %p63 = scmp.eq.s32.totalorder %s9, 0
      %p64 = por %p62, %p63
      %p65 = scmp.ne.s32.totalorder %s57, %s59
      %p66 = scmp.eq.s32.totalorder %s14, 1
      %p67 = por %p65, %p66
      %p68 = scmp.ne.s32.totalorder %s59, %s60
      %p69 = scmp.eq.s32.totalorder %s14, 0
      %p70 = por %p68, %p69
      %p71 = scmp.ne.s32.totalorder %s59, %s60
      %p72 = scmp.eq.s32.totalorder %s15, 1
      %p73 = por %p71, %p72
      %p75 = scmp.ne.s32.totalorder %s60, %s74
      %p76 = scmp.eq.s32.totalorder %s15, 0
      %p77 = por %p75, %p76
      %s78 = ssub.s32 %s16, %s28
      %s79 = ssub.s32 %s17, %s24
      %s80 = sor.u32 %s78, %s79
      %p81 = scmp.eq.s32.totalorder %s80, 0
      %s83 = sadd.s32 %s82, 1
      %s84 = scalar_select %p81, %s82, %s83
      %p87 = pneg %p81
      %p88 = scmp.eq.s32.totalorder %s9, 1
      %p89 = por %p87, %p88
      %p90 = scmp.ne.s32.totalorder %s82, %s85
      %p91 = scmp.eq.s32.totalorder %s9, 0
      %p92 = por %p90, %p91
      %p93 = scmp.ne.s32.totalorder %s82, %s85
      %p94 = scmp.eq.s32.totalorder %s14, 1
      %p95 = por %p93, %p94
      %p96 = scmp.ne.s32.totalorder %s85, %s86
      %p97 = scmp.eq.s32.totalorder %s14, 0
      %p98 = por %p96, %p97
      %p99 = scmp.ne.s32.totalorder %s85, %s86
      %p100 = scmp.eq.s32.totalorder %s15, 1
      %p101 = por %p99, %p100
      %p103 = scmp.ne.s32.totalorder %s86, %s102
      %p104 = scmp.eq.s32.totalorder %s15, 0
      %p105 = por %p103, %p104
      %p106 = scmp.le.s32.totalorder 1, %s9
      %p107 = scmp.lt.s32.totalorder %s9, 3
      %p108 = pnand %p106, %p107
      %p109 = pneg %p108
      // Predicated region
      $region9: #{tpu_custom_call.1} parent=5 // pred_check
        _
      $region10: #{tpu_custom_call.1} parent=5 // pred_check_branch
        %111 = sbr.rel (%p108) target = $region12
      $region11: #{tpu_custom_call.1} parent=5 // pred_region
        %s112 = ssub.s32 %s9, 1
        // Predicated region
        $region13: #{tpu_custom_call.1} parent=11 // pred_check
          %p113 = pneg %p70
        $region14: #{tpu_custom_call.1} parent=11 // pred_check_branch
          %115 = sbr.rel (%p113) target = $region16
        $region15: #{tpu_custom_call.1} parent=11 // pred_region
          %117 = vsyncadd [#allocation3], 0
          %s118 = sshll.u32 %s1, 4
          %s119 = int_to_ptr.hbm [resolvable:$true] %s118
          %s120 = sshll.u32 [#allocation2], 4
          %s121 = int_to_ptr.vmem [resolvable:$true] %s120
          %126 = dma.hbm_to_vmem [thread:$0]  %s119, 8704, %s121, [#allocation3], 256, 256, 16
        $region16: #{tpu_custom_call.1} parent=11 // pred_fallthru
          _
      $region12: #{tpu_custom_call.1} parent=5 // pred_fallthru
        _
      %p127 = scmp.lt.s32.totalorder %s9, 2
      // Predicated region
      $region17: #{tpu_custom_call.1} parent=5 // pred_check
        %p128 = pneg %p127
      $region18: #{tpu_custom_call.1} parent=5 // pred_check_branch
        %130 = sbr.rel (%p128) target = $region20
      $region19: #{tpu_custom_call.1} parent=5 // pred_region
        // Predicated region
        $region21: #{tpu_custom_call.1} parent=19 // pred_check
          %p131 = pneg %p43
        $region22: #{tpu_custom_call.1} parent=19 // pred_check_branch
          %133 = sbr.rel (%p131) target = $region24
        $region23: #{tpu_custom_call.1} parent=19 // pred_region
          %s134 = smul.u32 2, %s17
          %p135 = scmp.lt.s32.totalorder %s16, 1
          %s136 = scalar_select %p135, %s16, 1
          %p137 = scmp.lt.s32.totalorder %s134, 1
          %s138 = scalar_select %p137, %s134, 1
          %s139 = smul.addr %s138, 2
          %s140 = smul.addr %s136, 4
          %s141 = sadd.s32 %s139, %s140
          %s142 = smul.addr %s141, 8
          %s143 = scalar_lea.vmem %s0, %s142
          %s144 = smul.u32 2, %s17
        $region24: #{tpu_custom_call.1} parent=19 // pred_fallthru
          _
      $region20: #{tpu_custom_call.1} parent=5 // pred_fallthru
        _
      %p145 = scmp.le.s32.totalorder 1, %s9
      %p146 = scmp.lt.s32.totalorder %s9, 3
      %p147 = pnand %p145, %p146
      %p148 = pneg %p147
      // Predicated region
      $region25: #{tpu_custom_call.1} parent=5 // pred_check
        _
      $region26: #{tpu_custom_call.1} parent=5 // pred_check_branch
        %150 = sbr.rel (%p147) target = $region28
      $region27: #{tpu_custom_call.1} parent=5 // pred_region
        %s151 = ssub.s32 %s9, 1
        // Predicated region
        $region29: #{tpu_custom_call.1} parent=27 // pred_check
          %p152 = pneg %p70
        $region30: #{tpu_custom_call.1} parent=27 // pred_check_branch
          %154 = sbr.rel (%p152) target = $region32
        $region31: #{tpu_custom_call.1} parent=27 // pred_region
          %156 = dma.done [#allocation3], 8704
        $region32: #{tpu_custom_call.1} parent=27 // pred_fallthru
          _
        %s157 = smul.u32 2, %s19
        %p158 = scmp.lt.s32.totalorder %s18, 1
        %s159 = scalar_select %p158, %s18, 1
        %p160 = scmp.lt.s32.totalorder %s157, 1
        %s161 = scalar_select %p160, %s157, 1
        %s162 = smul.addr %s161, 2
        %s163 = smul.addr %s159, 4
        %s164 = sadd.s32 %s162, %s163
        %s165 = smul.addr %s164, 8
        %s166 = scalar_lea.vmem %s0, %s165
        %p167 = pneg %p49
        %p168 = pneg %p46
        %p169 = pneg %p70
        %p170 = pneg %p67
        %p171 = pneg %p98
        %p172 = pneg %p95
        %p173 = scmp.lt.s32.totalorder %s18, 1
        %s174 = scalar_select %p173, %s18, 1
        %p175 = scmp.lt.s32.totalorder %s19, 0
        %s176 = scalar_select %p175, %s19, 0
        %s177 = smul.addr %s174, 17
        %s178 = sadd.s32 %s176, %s177
        %s179 = smul.addr %s178, 8
        %s180 = scalar_lea.vmem %s2, %s179
        %s181 = smul.u32 2, %s19
        %p182 = scmp.lt.s32.totalorder %s18, 1
        %s183 = scalar_select %p182, %s18, 1
        %p184 = scmp.lt.s32.totalorder %s181, 1
        %s185 = scalar_select %p184, %s181, 1
        %s186 = smul.addr %s185, 2
        %s187 = smul.addr %s183, 4
        %s188 = sadd.s32 %s186, %s187
        %s189 = smul.addr %s188, 8
        %s190 = scalar_lea.vmem %s0, %s189
        %s191 = smul.u32 2, %s19
        %p192 = scmp.lt.s32.totalorder %s18, 1
        %s193 = scalar_select %p192, %s18, 1
        %p194 = scmp.lt.s32.totalorder %s19, 0
        %s195 = scalar_select %p194, %s19, 0
        %s196 = smul.addr %s193, 17
        %s197 = sadd.s32 %s195, %s196
        %s198 = smul.addr %s197, 8
        %s199 = scalar_lea.vmem %s2, %s198
        %v200 = vld [vmem:[%s190] sm:$0xff]
        %v201 = vld [vmem:[%s190 + $0x8] sm:$0xff]
        %v202 = vld [vmem:[%s190 + $0x10] sm:$0x1f]
        %v203 = vld [vmem:[%s190 + $0x18] sm:$0x1f]
        %v204 = vld [vmem:[#allocation2] sm:$0xff]
        %v205 = vld [vmem:[#allocation2 + $0x8] sm:$0xff]
        %v206 = vld [vmem:[#allocation2 + $0x10] sm:$0xff]
        %v207 = vld [vmem:[#allocation2 + $0x18] sm:$0xff]
        %v208 = vld [vmem:[#allocation2 + $0x20] sm:$0xff]
        %v209 = vld [vmem:[#allocation2 + $0x28] sm:$0xff]
        %v210 = vld [vmem:[#allocation2 + $0x30] sm:$0xff]
        %v211 = vld [vmem:[#allocation2 + $0x38] sm:$0xff]
        %v212 = vld [vmem:[#allocation2 + $0x40] sm:$0xff]
        %v213 = vld [vmem:[#allocation2 + $0x48] sm:$0xff]
        %v214 = vld [vmem:[#allocation2 + $0x50] sm:$0xff]
        %v215 = vld [vmem:[#allocation2 + $0x58] sm:$0xff]
        %v216 = vld [vmem:[#allocation2 + $0x60] sm:$0xff]
        %v217 = vld [vmem:[#allocation2 + $0x68] sm:$0xff]
        %v218 = vld [vmem:[#allocation2 + $0x70] sm:$0xff]
        %v219 = vld [vmem:[#allocation2 + $0x78] sm:$0xff]
        %v220 = vld [vmem:[#allocation2 + $0x80] sm:$0xff]
        %v221 = vld [vmem:[#allocation2 + $0x88] sm:$0xff]
        %v222 = vld [vmem:[#allocation2 + $0x90] sm:$0xff]
        %v223 = vld [vmem:[#allocation2 + $0x98] sm:$0xff]
        %v224 = vld [vmem:[#allocation2 + $0xa0] sm:$0xff]
        %v225 = vld [vmem:[#allocation2 + $0xa8] sm:$0xff]
        %v226 = vld [vmem:[#allocation2 + $0xb0] sm:$0xff]
        %v227 = vld [vmem:[#allocation2 + $0xb8] sm:$0xff]
        %v228 = vld [vmem:[#allocation2 + $0xc0] sm:$0xff]
        %v229 = vld [vmem:[#allocation2 + $0xc8] sm:$0xff]
        %v230 = vld [vmem:[#allocation2 + $0xd0] sm:$0xff]
        %v231 = vld [vmem:[#allocation2 + $0xd8] sm:$0xff]
        %v232 = vld [vmem:[#allocation2 + $0xe0] sm:$0xff]
        %v233 = vld [vmem:[#allocation2 + $0xe8] sm:$0xff]
        %v234 = vld [vmem:[#allocation2 + $0xf0] sm:$0xff]
        %v235 = vld [vmem:[#allocation2 + $0xf8] sm:$0xff]
        %v236 = vld [vmem:[#allocation2 + $0x100] sm:$0xff]
        %v237 = vld [vmem:[#allocation2 + $0x108] sm:$0xff]
        %v238 = vld [vmem:[#allocation2 + $0x110] sm:$0xff]
        %v239 = vld [vmem:[#allocation2 + $0x118] sm:$0xff]
        %v240 = vld [vmem:[#allocation2 + $0x120] sm:$0xff]
        %v241 = vld [vmem:[#allocation2 + $0x128] sm:$0xff]
        %v242 = vld [vmem:[#allocation2 + $0x130] sm:$0xff]
        %v243 = vld [vmem:[#allocation2 + $0x138] sm:$0xff]
        %v244 = vld [vmem:[#allocation2 + $0x140] sm:$0xff]
        %v245 = vld [vmem:[#allocation2 + $0x148] sm:$0xff]
        %v246 = vld [vmem:[#allocation2 + $0x150] sm:$0xff]
        %v247 = vld [vmem:[#allocation2 + $0x158] sm:$0xff]
        %v248 = vld [vmem:[#allocation2 + $0x160] sm:$0xff]
        %v249 = vld [vmem:[#allocation2 + $0x168] sm:$0xff]
        %v250 = vld [vmem:[#allocation2 + $0x170] sm:$0xff]
        %v251 = vld [vmem:[#allocation2 + $0x178] sm:$0xff]
        %v252 = vld [vmem:[#allocation2 + $0x180] sm:$0xff]
        %v253 = vld [vmem:[#allocation2 + $0x188] sm:$0xff]
        %v254 = vld [vmem:[#allocation2 + $0x190] sm:$0xff]
        %v255 = vld [vmem:[#allocation2 + $0x198] sm:$0xff]
        %v256 = vld [vmem:[#allocation2 + $0x1a0] sm:$0xff]
        %v257 = vld [vmem:[#allocation2 + $0x1a8] sm:$0xff]
        %v258 = vld [vmem:[#allocation2 + $0x1b0] sm:$0xff]
        %v259 = vld [vmem:[#allocation2 + $0x1b8] sm:$0xff]
        %v260 = vld [vmem:[#allocation2 + $0x1c0] sm:$0xff]
        %v261 = vld [vmem:[#allocation2 + $0x1c8] sm:$0xff]
        %v262 = vld [vmem:[#allocation2 + $0x1d0] sm:$0xff]
        %v263 = vld [vmem:[#allocation2 + $0x1d8] sm:$0xff]
        %v264 = vld [vmem:[#allocation2 + $0x1e0] sm:$0xff]
        %v265 = vld [vmem:[#allocation2 + $0x1e8] sm:$0xff]
        %v266 = vld [vmem:[#allocation2 + $0x1f0] sm:$0xff]
        %v267 = vld [vmem:[#allocation2 + $0x1f8] sm:$0xff]
        %v268 = vld [vmem:[#allocation2 + $0x200] sm:$0xff]
        %v269 = vld [vmem:[#allocation2 + $0x208] sm:$0xff]
        %v270 = vld [vmem:[#allocation2 + $0x210] sm:$0xff]
        %v271 = vld [vmem:[#allocation2 + $0x218] sm:$0xff]
        %272 = vmatpush.xpose.msra.mxu0 0.0
        %273 = vmatpush.xpose.msra.mxu0 0.0
        %274 = vmatpush.xpose.msra.mxu0 0.0
        %275 = vmatpush.xpose.msra.mxu0 0.0
        %276 = vmatpush.xpose.msra.mxu0 0.0
        %277 = vmatpush.xpose.msra.mxu0 0.0
        %278 = vmatpush.xpose.msra.mxu0 0.0
        %279 = vmatpush.xpose.msra.mxu0 0.0
        %280 = vmatpush.xpose.msra.mxu0 0.0
        %281 = vmatpush.xpose.msra.mxu0 0.0
        %282 = vmatpush.xpose.msra.mxu0 0.0
        %283 = vmatpush.xpose.msra.mxu0 0.0
        %284 = vmatpush.xpose.msra.mxu0 0.0
        %285 = vmatpush.xpose.msra.mxu0 0.0
        %286 = vmatpush.xpose.msra.mxu0 %v202
        %287 = vmatpush.xpose.msra.mxu0 %v200
        %288 = vmatmul.f32.gmra.mxu0 %v204
        %v289 = vpop.f32.mrf.mxu0
        %v290 = vadd.f32 0.0, %v289
        %291 = vmatmul.f32.gmra.mxu0 %v206
        %v292 = vpop.f32.mrf.mxu0
        %v293 = vadd.f32 0.0, %v292
        %294 = vmatmul.f32.gmra.mxu0 %v208
        %v295 = vpop.f32.mrf.mxu0
        %v296 = vadd.f32 0.0, %v295
        %297 = vmatmul.f32.gmra.mxu0 %v210
        %v298 = vpop.f32.mrf.mxu0
        %v299 = vadd.f32 0.0, %v298
        %300 = vmatmul.f32.gmra.mxu0 %v212
        %v301 = vpop.f32.mrf.mxu0
        %v302 = vadd.f32 0.0, %v301
        %303 = vmatmul.f32.gmra.mxu0 %v214
        %v304 = vpop.f32.mrf.mxu0
        %v305 = vadd.f32 0.0, %v304
        %306 = vmatmul.f32.gmra.mxu0 %v216
        %v307 = vpop.f32.mrf.mxu0
        %v308 = vadd.f32 0.0, %v307
        %309 = vmatmul.f32.gmra.mxu0 %v218
        %v310 = vpop.f32.mrf.mxu0
        %v311 = vadd.f32 0.0, %v310
        %312 = vmatmul.f32.gmra.mxu0 %v220
        %v313 = vpop.f32.mrf.mxu0
        %v314 = vadd.f32 0.0, %v313
        %315 = vmatmul.f32.gmra.mxu0 %v222
        %v316 = vpop.f32.mrf.mxu0
        %v317 = vadd.f32 0.0, %v316
        %318 = vmatmul.f32.gmra.mxu0 %v224
        %v319 = vpop.f32.mrf.mxu0
        %v320 = vadd.f32 0.0, %v319
        %321 = vmatmul.f32.gmra.mxu0 %v226
        %v322 = vpop.f32.mrf.mxu0
        %v323 = vadd.f32 0.0, %v322
        %324 = vmatmul.f32.gmra.mxu0 %v228
        %v325 = vpop.f32.mrf.mxu0
        %v326 = vadd.f32 0.0, %v325
        %327 = vmatmul.f32.gmra.mxu0 %v230
        %v328 = vpop.f32.mrf.mxu0
        %v329 = vadd.f32 0.0, %v328
        %330 = vmatmul.f32.gmra.mxu0 %v232
        %v331 = vpop.f32.mrf.mxu0
        %v332 = vadd.f32 0.0, %v331
        %333 = vmatmul.f32.gmra.mxu0 %v234
        %v334 = vpop.f32.mrf.mxu0
        %v335 = vadd.f32 0.0, %v334
        %336 = vmatmul.f32.gmra.mxu0 %v236
        %v337 = vpop.f32.mrf.mxu0
        %v338 = vadd.f32 0.0, %v337
        %339 = vmatmul.f32.gmra.mxu0 %v238
        %v340 = vpop.f32.mrf.mxu0
        %v341 = vadd.f32 0.0, %v340
        %342 = vmatmul.f32.gmra.mxu0 %v240
        %v343 = vpop.f32.mrf.mxu0
        %v344 = vadd.f32 0.0, %v343
        %345 = vmatmul.f32.gmra.mxu0 %v242
        %v346 = vpop.f32.mrf.mxu0
        %v347 = vadd.f32 0.0, %v346
        %348 = vmatmul.f32.gmra.mxu0 %v244
        %v349 = vpop.f32.mrf.mxu0
        %v350 = vadd.f32 0.0, %v349
        %351 = vmatmul.f32.gmra.mxu0 %v246
        %v352 = vpop.f32.mrf.mxu0
        %v353 = vadd.f32 0.0, %v352
        %354 = vmatmul.f32.gmra.mxu0 %v248
        %v355 = vpop.f32.mrf.mxu0
        %v356 = vadd.f32 0.0, %v355
        %357 = vmatmul.f32.gmra.mxu0 %v250
        %v358 = vpop.f32.mrf.mxu0
        %v359 = vadd.f32 0.0, %v358
        %360 = vmatmul.f32.gmra.mxu0 %v252
        %v361 = vpop.f32.mrf.mxu0
        %v362 = vadd.f32 0.0, %v361
        %363 = vmatmul.f32.gmra.mxu0 %v254
        %v364 = vpop.f32.mrf.mxu0
        %v365 = vadd.f32 0.0, %v364
        %366 = vmatmul.f32.gmra.mxu0 %v256
        %v367 = vpop.f32.mrf.mxu0
        %v368 = vadd.f32 0.0, %v367
        %369 = vmatmul.f32.gmra.mxu0 %v258
        %v370 = vpop.f32.mrf.mxu0
        %v371 = vadd.f32 0.0, %v370
        %372 = vmatmul.f32.gmra.mxu0 %v260
        %v373 = vpop.f32.mrf.mxu0
        %v374 = vadd.f32 0.0, %v373
        %375 = vmatmul.f32.gmra.mxu0 %v262
        %v376 = vpop.f32.mrf.mxu0
        %v377 = vadd.f32 0.0, %v376
        %378 = vmatmul.f32.gmra.mxu0 %v264
        %v379 = vpop.f32.mrf.mxu0
        %v380 = vadd.f32 0.0, %v379
        %381 = vmatmul.f32.gmra.mxu0 %v266
        %v382 = vpop.f32.mrf.mxu0
        %v383 = vadd.f32 0.0, %v382
        %384 = vmatmul.f32.gmra.mxu0 %v268
        %v385 = vpop.f32.mrf.mxu0
        %v386 = vadd.f32 0.0, %v385
        %387 = vmatmul.f32.gmra.mxu0 %v270
        %v388 = vpop.f32.mrf.mxu0
        %v389 = vadd.f32 0.0, %v388
        %390 = vdwg.mxu0
        %391 = vmatpush.xpose.msra.mxu0 0.0
        %392 = vmatpush.xpose.msra.mxu0 0.0
        %393 = vmatpush.xpose.msra.mxu0 0.0
        %394 = vmatpush.xpose.msra.mxu0 0.0
        %395 = vmatpush.xpose.msra.mxu0 0.0
        %396 = vmatpush.xpose.msra.mxu0 0.0
        %397 = vmatpush.xpose.msra.mxu0 0.0
        %398 = vmatpush.xpose.msra.mxu0 0.0
        %399 = vmatpush.xpose.msra.mxu0 0.0
        %400 = vmatpush.xpose.msra.mxu0 0.0
        %401 = vmatpush.xpose.msra.mxu0 0.0
        %402 = vmatpush.xpose.msra.mxu0 0.0
        %403 = vmatpush.xpose.msra.mxu0 0.0
        %404 = vmatpush.xpose.msra.mxu0 0.0
        %405 = vmatpush.xpose.msra.mxu0 %v203
        %406 = vmatpush.xpose.msra.mxu0 %v201
        %407 = vmatmul.f32.gmra.mxu0 %v205
        %v408 = vpop.f32.mrf.mxu0
        %v409 = vadd.f32 %v290, %v408
        %410 = vmatmul.f32.gmra.mxu0 %v207
        %v411 = vpop.f32.mrf.mxu0
        %v412 = vadd.f32 %v293, %v411
        %413 = vmatmul.f32.gmra.mxu0 %v209
        %v414 = vpop.f32.mrf.mxu0
        %v415 = vadd.f32 %v296, %v414
        %416 = vmatmul.f32.gmra.mxu0 %v211
        %v417 = vpop.f32.mrf.mxu0
        %v418 = vadd.f32 %v299, %v417
        %419 = vmatmul.f32.gmra.mxu0 %v213
        %v420 = vpop.f32.mrf.mxu0
        %v421 = vadd.f32 %v302, %v420
        %422 = vmatmul.f32.gmra.mxu0 %v215
        %v423 = vpop.f32.mrf.mxu0
        %v424 = vadd.f32 %v305, %v423
        %425 = vmatmul.f32.gmra.mxu0 %v217
        %v426 = vpop.f32.mrf.mxu0
        %v427 = vadd.f32 %v308, %v426
        %428 = vmatmul.f32.gmra.mxu0 %v219
        %v429 = vpop.f32.mrf.mxu0
        %v430 = vadd.f32 %v311, %v429
        %431 = vmatmul.f32.gmra.mxu0 %v221
        %v432 = vpop.f32.mrf.mxu0
        %v433 = vadd.f32 %v314, %v432
        %434 = vmatmul.f32.gmra.mxu0 %v223
        %v435 = vpop.f32.mrf.mxu0
        %v436 = vadd.f32 %v317, %v435
        %437 = vmatmul.f32.gmra.mxu0 %v225
        %v438 = vpop.f32.mrf.mxu0
        %v439 = vadd.f32 %v320, %v438
        %440 = vmatmul.f32.gmra.mxu0 %v227
        %v441 = vpop.f32.mrf.mxu0
        %v442 = vadd.f32 %v323, %v441
        %443 = vmatmul.f32.gmra.mxu0 %v229
        %v444 = vpop.f32.mrf.mxu0
        %v445 = vadd.f32 %v326, %v444
        %446 = vmatmul.f32.gmra.mxu0 %v231
        %v447 = vpop.f32.mrf.mxu0
        %v448 = vadd.f32 %v329, %v447
        %449 = vmatmul.f32.gmra.mxu0 %v233
        %v450 = vpop.f32.mrf.mxu0
        %v451 = vadd.f32 %v332, %v450
        %452 = vmatmul.f32.gmra.mxu0 %v235
        %v453 = vpop.f32.mrf.mxu0
        %v454 = vadd.f32 %v335, %v453
        %455 = vmatmul.f32.gmra.mxu0 %v237
        %v456 = vpop.f32.mrf.mxu0
        %v457 = vadd.f32 %v338, %v456
        %458 = vmatmul.f32.gmra.mxu0 %v239
        %v459 = vpop.f32.mrf.mxu0
        %v460 = vadd.f32 %v341, %v459
        %461 = vmatmul.f32.gmra.mxu0 %v241
        %v462 = vpop.f32.mrf.mxu0
        %v463 = vadd.f32 %v344, %v462
        %464 = vmatmul.f32.gmra.mxu0 %v243
        %v465 = vpop.f32.mrf.mxu0
        %v466 = vadd.f32 %v347, %v465
        %467 = vmatmul.f32.gmra.mxu0 %v245
        %v468 = vpop.f32.mrf.mxu0
        %v469 = vadd.f32 %v350, %v468
        %470 = vmatmul.f32.gmra.mxu0 %v247
        %v471 = vpop.f32.mrf.mxu0
        %v472 = vadd.f32 %v353, %v471
        %473 = vmatmul.f32.gmra.mxu0 %v249
        %v474 = vpop.f32.mrf.mxu0
        %v475 = vadd.f32 %v356, %v474
        %476 = vmatmul.f32.gmra.mxu0 %v251
        %v477 = vpop.f32.mrf.mxu0
        %v478 = vadd.f32 %v359, %v477
        %479 = vmatmul.f32.gmra.mxu0 %v253
        %v480 = vpop.f32.mrf.mxu0
        %v481 = vadd.f32 %v362, %v480
        %482 = vmatmul.f32.gmra.mxu0 %v255
        %v483 = vpop.f32.mrf.mxu0
        %v484 = vadd.f32 %v365, %v483
        %485 = vmatmul.f32.gmra.mxu0 %v257
        %v486 = vpop.f32.mrf.mxu0
        %v487 = vadd.f32 %v368, %v486
        %488 = vmatmul.f32.gmra.mxu0 %v259
        %v489 = vpop.f32.mrf.mxu0
        %v490 = vadd.f32 %v371, %v489
        %491 = vmatmul.f32.gmra.mxu0 %v261
        %v492 = vpop.f32.mrf.mxu0
        %v493 = vadd.f32 %v374, %v492
        %494 = vmatmul.f32.gmra.mxu0 %v263
        %v495 = vpop.f32.mrf.mxu0
        %v496 = vadd.f32 %v377, %v495
        %497 = vmatmul.f32.gmra.mxu0 %v265
        %v498 = vpop.f32.mrf.mxu0
        %v499 = vadd.f32 %v380, %v498
        %500 = vmatmul.f32.gmra.mxu0 %v267
        %v501 = vpop.f32.mrf.mxu0
        %v502 = vadd.f32 %v383, %v501
        %503 = vmatmul.f32.gmra.mxu0 %v269
        %v504 = vpop.f32.mrf.mxu0
        %v505 = vadd.f32 %v386, %v504
        %506 = vmatmul.f32.gmra.mxu0 %v271
        %v507 = vpop.f32.mrf.mxu0
        %v508 = vadd.f32 %v389, %v507
        %509 = vdwg.mxu0
        %v510 = vmul.f32 %v409, %v409
        %v511 = vmul.f32 %v412, %v412
        %v512 = vmul.f32 %v415, %v415
        %v513 = vmul.f32 %v418, %v418
        %v514 = vmul.f32 %v421, %v421
        %v515 = vmul.f32 %v424, %v424
        %v516 = vmul.f32 %v427, %v427
        %v517 = vmul.f32 %v430, %v430
        %v518 = vmul.f32 %v433, %v433
        %v519 = vmul.f32 %v436, %v436
        %v520 = vmul.f32 %v439, %v439
        %v521 = vmul.f32 %v442, %v442
        %v522 = vmul.f32 %v445, %v445
        %v523 = vmul.f32 %v448, %v448
        %v524 = vmul.f32 %v451, %v451
        %v525 = vmul.f32 %v454, %v454
        %v526 = vmul.f32 %v457, %v457
        %v527 = vmul.f32 %v460, %v460
        %v528 = vmul.f32 %v463, %v463
        %v529 = vmul.f32 %v466, %v466
        %v530 = vmul.f32 %v469, %v469
        %v531 = vmul.f32 %v472, %v472
        %v532 = vmul.f32 %v475, %v475
        %v533 = vmul.f32 %v478, %v478
        %v534 = vmul.f32 %v481, %v481
        %v535 = vmul.f32 %v484, %v484
        %v536 = vmul.f32 %v487, %v487
        %v537 = vmul.f32 %v490, %v490
        %v538 = vmul.f32 %v493, %v493
        %v539 = vmul.f32 %v496, %v496
        %v540 = vmul.f32 %v499, %v499
        %v541 = vmul.f32 %v502, %v502
        %v542 = vmul.f32 %v505, %v505
        %v543 = vmul.f32 %v508, %v508
        %v544 = vadd.f32 %v510, %v527
        %v545 = vadd.f32 %v511, %v528
        %v546 = vadd.f32 %v512, %v529
        %v547 = vadd.f32 %v513, %v530
        %v548 = vadd.f32 %v514, %v531
        %v549 = vadd.f32 %v515, %v532
        %v550 = vadd.f32 %v516, %v533
        %v551 = vadd.f32 %v517, %v534
        %v552 = vadd.f32 %v518, %v535
        %v553 = vadd.f32 %v519, %v536
        %v554 = vadd.f32 %v520, %v537
        %v555 = vadd.f32 %v521, %v538
        %v556 = vadd.f32 %v522, %v539
        %v557 = vadd.f32 %v523, %v540
        %v558 = vadd.f32 %v524, %v541
        %v559 = vadd.f32 %v525, %v542
        %v560 = vadd.f32 %v526, %v543
        %v561 = vlog2.pop %v544
        %v562 = vmul.f32 %v561, 0.6931472
        %v563 = vlog2.pop %v545
        %v564 = vmul.f32 %v563, 0.6931472
        %v565 = vlog2.pop %v546
        %v566 = vmul.f32 %v565, 0.6931472
        %v567 = vlog2.pop %v547
        %v568 = vmul.f32 %v567, 0.6931472
        %v569 = vlog2.pop %v548
        %v570 = vmul.f32 %v569, 0.6931472
        %v571 = vlog2.pop %v549
        %v572 = vmul.f32 %v571, 0.6931472
        %v573 = vlog2.pop %v550
        %v574 = vmul.f32 %v573, 0.6931472
        %v575 = vlog2.pop %v551
        %v576 = vmul.f32 %v575, 0.6931472
        %v577 = vlog2.pop %v552
        %v578 = vmul.f32 %v577, 0.6931472
        %v579 = vlog2.pop %v553
        %v580 = vmul.f32 %v579, 0.6931472
        %v581 = vlog2.pop %v554
        %v582 = vmul.f32 %v581, 0.6931472
        %v583 = vlog2.pop %v555
        %v584 = vmul.f32 %v583, 0.6931472
        %v585 = vlog2.pop %v556
        %v586 = vmul.f32 %v585, 0.6931472
        %v587 = vlog2.pop %v557
        %v588 = vmul.f32 %v587, 0.6931472
        %v589 = vlog2.pop %v558
        %v590 = vmul.f32 %v589, 0.6931472
        %v591 = vlog2.pop %v559
        %v592 = vmul.f32 %v591, 0.6931472
        %v593 = vlog2.pop %v560
        %v594 = vmul.f32 %v593, 0.6931472
        %v595 = vmul.f32 %v562, 4.3429446
        %v596 = vmul.f32 %v564, 4.3429446
        %v597 = vmul.f32 %v566, 4.3429446
        %v598 = vmul.f32 %v568, 4.3429446
        %v599 = vmul.f32 %v570, 4.3429446
        %v600 = vmul.f32 %v572, 4.3429446
        %v601 = vmul.f32 %v574, 4.3429446
        %v602 = vmul.f32 %v576, 4.3429446
        %v603 = vmul.f32 %v578, 4.3429446
        %v604 = vmul.f32 %v580, 4.3429446
        %v605 = vmul.f32 %v582, 4.3429446
        %v606 = vmul.f32 %v584, 4.3429446
        %v607 = vmul.f32 %v586, 4.3429446
        %v608 = vmul.f32 %v588, 4.3429446
        %v609 = vmul.f32 %v590, 4.3429446
        %v610 = vmul.f32 %v592, 4.3429446
        %v611 = vmul.f32 %v594, 4.3429446
        %vm612 = vcmask 105472
        %613 = vst.msk [vmem:[%s199] sm:$0xff] %vm612, %v595
        %614 = vst.msk [vmem:[%s199 + $0x8] sm:$0xff] %vm612, %v596
        %615 = vst.msk [vmem:[%s199 + $0x10] sm:$0xff] %vm612, %v597
        %616 = vst.msk [vmem:[%s199 + $0x18] sm:$0xff] %vm612, %v598
        %617 = vst.msk [vmem:[%s199 + $0x20] sm:$0xff] %vm612, %v599
        %618 = vst.msk [vmem:[%s199 + $0x28] sm:$0xff] %vm612, %v600
        %619 = vst.msk [vmem:[%s199 + $0x30] sm:$0xff] %vm612, %v601
        %620 = vst.msk [vmem:[%s199 + $0x38] sm:$0xff] %vm612, %v602
        %621 = vst.msk [vmem:[%s199 + $0x40] sm:$0xff] %vm612, %v603
        %622 = vst.msk [vmem:[%s199 + $0x48] sm:$0xff] %vm612, %v604
        %623 = vst.msk [vmem:[%s199 + $0x50] sm:$0xff] %vm612, %v605
        %624 = vst.msk [vmem:[%s199 + $0x58] sm:$0xff] %vm612, %v606
        %625 = vst.msk [vmem:[%s199 + $0x60] sm:$0xff] %vm612, %v607
        %626 = vst.msk [vmem:[%s199 + $0x68] sm:$0xff] %vm612, %v608
        %627 = vst.msk [vmem:[%s199 + $0x70] sm:$0xff] %vm612, %v609
        %628 = vst.msk [vmem:[%s199 + $0x78] sm:$0xff] %vm612, %v610
        %vm629 = vcmask 98304
        %630 = vst.msk [vmem:[%s199 + $0x80] sm:$0x1] %vm629, %v611
        %p631 = scmp.lt.s32.totalorder %s18, 1
        %s632 = scalar_select %p631, %s18, 1
        %p633 = scmp.lt.s32.totalorder %s19, 0
        %s634 = scalar_select %p633, %s19, 0
        %s635 = smul.addr %s632, 17
        %s636 = sadd.s32 %s634, %s635
        %s637 = smul.addr %s636, 8
        %s638 = scalar_lea.vmem %s2, %s637
        // Predicated region
        $region33: #{tpu_custom_call.1} parent=27 // pred_check
          %p639 = pneg %p95
        $region34: #{tpu_custom_call.1} parent=27 // pred_check_branch
          %641 = sbr.rel (%p639) target = $region36
        $region35: #{tpu_custom_call.1} parent=27 // pred_region
          _
        $region36: #{tpu_custom_call.1} parent=27 // pred_fallthru
          _
      $region28: #{tpu_custom_call.1} parent=5 // pred_fallthru
        _
      %p642 = scmp.le.s32.totalorder 2, %s9
      // Predicated region
      $region37: #{tpu_custom_call.1} parent=5 // pred_check
        %p643 = pneg %p642
      $region38: #{tpu_custom_call.1} parent=5 // pred_check_branch
        %645 = sbr.rel (%p643) target = $region40
      $region39: #{tpu_custom_call.1} parent=5 // pred_region
        %s646 = ssub.s32 %s9, 2
        // Predicated region
        $region41: #{tpu_custom_call.1} parent=39 // pred_check
          %p647 = pneg %p101
        $region42: #{tpu_custom_call.1} parent=39 // pred_check_branch
          %649 = sbr.rel (%p647) target = $region44
        $region43: #{tpu_custom_call.1} parent=39 // pred_region
          %p650 = scmp.lt.s32.totalorder %s20, 1
          %s651 = scalar_select %p650, %s20, 1
          %p652 = scmp.lt.s32.totalorder %s21, 0
          %s653 = scalar_select %p652, %s21, 0
          %s654 = smul.addr %s651, 17
          %s655 = sadd.s32 %s653, %s654
          %s656 = smul.addr %s655, 8
          %s657 = scalar_lea.vmem %s2, %s656
        $region44: #{tpu_custom_call.1} parent=39 // pred_fallthru
          _
      $region40: #{tpu_custom_call.1} parent=5 // pred_fallthru
        _
    $region6: #{tpu_custom_call.1} parent=1 // loop_footer
      %s13 = sadd.s32 1, %s9
    $region7: #{tpu_custom_call.1} parent=1 // loop_footer_branch
      %8 = sbr.rel target = $region3
    $region8: #{tpu_custom_call.1} parent=1 // loop_exit
      _
    %658 = vsyncpa [#allocation3], 1
    %s659 = scalar_lea.sflag [#allocation3], 1
    %660 = vsyncpa %s659, 1

</llo_original>
